<compile_context>
chip_gen: v6e
topology: v6e:2x2x1
jax: 0.10.0
libtpu: 0.0.40
codegen_flags: <defaults>
</compile_context>

<pallas_src>
import itertools

import numpy as np
import jax
import jax.numpy as jnp
from jax.experimental import pallas as pl
from jax.experimental.pallas import tpu as pltpu

# ---------------- cfg.MODEL.SparseRCNN defaults (classes scaled down) --------
NUM_CLASSES  = 8       # NUM_CLASSES (small for the demo; default is 80)
CLASS_WEIGHT = 2.0     # CLASS_WEIGHT
GIOU_WEIGHT  = 2.0     # GIOU_WEIGHT
L1_WEIGHT    = 5.0     # L1_WEIGHT
NO_OBJECT_W  = 0.1     # NO_OBJECT_WEIGHT (unused on the focal path)
USE_FOCAL    = True
FOCAL_ALPHA  = 0.25
FOCAL_GAMMA  = 2.0     # gamma == 2.0  ->  implemented as x*x inside the kernels
EPS          = 1e-7    # guards union==0 / areac==0 for degenerate or padded boxes


# =============================== kernels =====================================
def cost_matrix_kernel(logits_ref, pb_ref, pbn_ref, oh_ref, tb_ref, tbn_ref,
                       cost_ref):
    """Per-image matcher cost matrix, laid out [T_pad, N_pad] (N on lanes).

    C = L1_W * cdist_l1 + CLASS_W * focal_cost + GIOU_W * (-GIoU)
    """
    x   = logits_ref[0]      # [C, Np]   pred logits (transposed)
    pb  = pb_ref[0]          # [4, Np]   pred boxes, abs xyxy (transposed)
    pbn = pbn_ref[0]         # [4, Np]   pred boxes / image_size (transposed)
    oh  = oh_ref[0]          # [Tp, C]   one-hot target classes
    tb  = tb_ref[0]          # [Tp, 4]   target boxes, abs xyxy
    tbn = tbn_ref[0]         # [Tp, 4]   target boxes / image_size

    # ---- focal classification cost via log-sigmoid identities ---------------
    #   -log(1 - sigmoid(x)) = softplus(x)
    #   -log(sigmoid(x))     = softplus(x) - x
    p  = jax.nn.sigmoid(x)
    sp = jnp.maximum(x, 0.0) + jnp.log1p(jnp.exp(-jnp.abs(x)))     # softplus(x)
    neg_cost = (1.0 - FOCAL_ALPHA) * (p * p) * sp                  # [C, Np]
    pos_cost = FOCAL_ALPHA * ((1.0 - p) * (1.0 - p)) * (sp - x)    # [C, Np]
    focal = pos_cost - neg_cost                                    # [C, Np]
    # gather per-target class rows via one-hot matmul (MXU): [Tp,C] @ [C,Np]
    cost_class = jnp.dot(oh, focal, preferred_element_type=jnp.float32)  # [Tp, Np]

    # ---- L1 cost (torch.cdist p=1) on image-size-normalized boxes -----------
    cost_bbox = (jnp.abs(pbn[0:1, :] - tbn[:, 0:1])
                 + jnp.abs(pbn[1:2, :] - tbn[:, 1:2])
                 + jnp.abs(pbn[2:3, :] - tbn[:, 2:3])
                 + jnp.abs(pbn[3:4, :] - tbn[:, 3:4]))             # [Tp, Np]

    # ---- pairwise GIoU cost on absolute boxes --------------------------------
    area_p = (pb[2:3, :] - pb[0:1, :]) * (pb[3:4, :] - pb[1:2, :])   # [1, Np]
    area_t = (tb[:, 2:3] - tb[:, 0:1]) * (tb[:, 3:4] - tb[:, 1:2])   # [Tp, 1]
    lt_x = jnp.maximum(pb[0:1, :], tb[:, 0:1])
    lt_y = jnp.maximum(pb[1:2, :], tb[:, 1:2])
    rb_x = jnp.minimum(pb[2:3, :], tb[:, 2:3])
    rb_y = jnp.minimum(pb[3:4, :], tb[:, 3:4])
    inter = jnp.maximum(rb_x - lt_x, 0.0) * jnp.maximum(rb_y - lt_y, 0.0)
    union = area_p + area_t - inter
    # matcher cost only needs relative ordering -> cheap approx EUP reciprocal
    iou = inter * pl.reciprocal(union + EPS, approx=True)
    ltc_x = jnp.minimum(pb[0:1, :], tb[:, 0:1])
    ltc_y = jnp.minimum(pb[1:2, :], tb[:, 1:2])
    rbc_x = jnp.maximum(pb[2:3, :], tb[:, 2:3])
    rbc_y = jnp.maximum(pb[3:4, :], tb[:, 3:4])
    areac = jnp.maximum(rbc_x - ltc_x, 0.0) * jnp.maximum(rbc_y - ltc_y, 0.0)
    giou = iou - (areac - union) * pl.reciprocal(areac + EPS, approx=True)

    cost_ref[0] = (L1_WEIGHT * cost_bbox
                   + CLASS_WEIGHT * cost_class
                   - GIOU_WEIGHT * giou)


def criterion_loss_kernel(logits_ref, labels_ref, src_ref, tgt_ref, isz_ref,
                          ce_ref, giou_ref, l1_ref):
    """Fused SetCriterion losses:
       - sigmoid focal loss (reduction='sum') on lane-dense (R, 128) views
       - matched-pair sum(1 - GIoU) and sum L1 on normalized boxes
    """
    # ---- sigmoid_focal_loss(logits, one_hot_labels, alpha, gamma, 'sum') ----
    x = logits_ref[...]                    # [R, 128]
    t = labels_ref[...]                    # [R, 128]
    p = jax.nn.sigmoid(x)
    ce = jnp.maximum(x, 0.0) - x * t + jnp.log1p(jnp.exp(-jnp.abs(x)))
    p_t = p * t + (1.0 - p) * (1.0 - t)
    loss = ce * ((1.0 - p_t) * (1.0 - p_t))
    alpha_t = FOCAL_ALPHA * t + (1.0 - FOCAL_ALPHA) * (1.0 - t)
    ce_ref[...] = jnp.sum(alpha_t * loss, keepdims=True)

    # ---- loss_boxes on matched pairs (exact division: reported loss) --------
    s = src_ref[...]                       # [P, 4] abs xyxy (matched predictions)
    tt = tgt_ref[...]                      # [P, 4] abs xyxy (matched targets)
    isz = isz_ref[...]                     # [P, 4] image sizes

    area1 = (s[:, 2:3] - s[:, 0:1]) * (s[:, 3:4] - s[:, 1:2])
    area2 = (tt[:, 2:3] - tt[:, 0:1]) * (tt[:, 3:4] - tt[:, 1:2])
    lt = jnp.maximum(s[:, 0:2], tt[:, 0:2])
    rb = jnp.minimum(s[:, 2:4], tt[:, 2:4])
    wh = jnp.maximum(rb - lt, 0.0)
    inter = wh[:, 0:1] * wh[:, 1:2]
    union = area1 + area2 - inter
    iou = inter / (union + EPS)
    ltc = jnp.minimum(s[:, 0:2], tt[:, 0:2])
    rbc = jnp.maximum(s[:, 2:4], tt[:, 2:4])
    whc = jnp.maximum(rbc - ltc, 0.0)
    areac = whc[:, 0:1] * whc[:, 1:2]
    giou = iou - (areac - union) / (areac + EPS)
    giou_ref[...] = jnp.sum(1.0 - giou, keepdims=True)

    sn = s / isz
    tn = tt / isz
    l1_ref[...] = jnp.sum(jnp.abs(sn - tn), keepdims=True)


# ============================= pallas wrappers ================================
def compute_cost_matrices(logits_t, pb_t, pbn_t, onehot, tbox, tboxn):
    """logits_t [B,C,Np], pb_t/pbn_t [B,4,Np], onehot [B,Tp,C], tbox/tboxn [B,Tp,4]
       -> cost [B, Tp, Np] (lane-dense)."""
    B, C, Np = logits_t.shape
    Tp = onehot.shape[1]
    return pl.pallas_call(
        cost_matrix_kernel,
        out_shape=jax.ShapeDtypeStruct((B, Tp, Np), jnp.float32),
        grid=(B,),
        in_specs=[
            pl.BlockSpec((1, C, Np), lambda b: (b, 0, 0)),
            pl.BlockSpec((1, 4, Np), lambda b: (b, 0, 0)),
            pl.BlockSpec((1, 4, Np), lambda b: (b, 0, 0)),
            pl.BlockSpec((1, Tp, C), lambda b: (b, 0, 0)),
            pl.BlockSpec((1, Tp, 4), lambda b: (b, 0, 0)),
            pl.BlockSpec((1, Tp, 4), lambda b: (b, 0, 0)),
        ],
        out_specs=pl.BlockSpec((1, Tp, Np), lambda b: (b, 0, 0)),
        # independent images -> shard across TensorCores on v7x; no-op on v5e/v6e.
        compiler_params=pltpu.CompilerParams(dimension_semantics=("parallel",)),
    )(logits_t, pb_t, pbn_t, onehot, tbox, tboxn)


def criterion_losses(logits2d, labels2d, src, tgt, isz):
    """Single fused pallas_call -> (focal_sum, giou_sum, l1_sum), each (1,1)."""
    R, L = logits2d.shape
    P = src.shape[0]
    return pl.pallas_call(
        criterion_loss_kernel,
        out_shape=(jax.ShapeDtypeStruct((1, 1), jnp.float32),
                   jax.ShapeDtypeStruct((1, 1), jnp.float32),
                   jax.ShapeDtypeStruct((1, 1), jnp.float32)),
        grid=(1,),
        in_specs=[pl.BlockSpec((R, L), lambda i: (0, 0)),
                  pl.BlockSpec((R, L), lambda i: (0, 0)),
                  pl.BlockSpec((P, 4), lambda i: (0, 0)),
                  pl.BlockSpec((P, 4), lambda i: (0, 0)),
                  pl.BlockSpec((P, 4), lambda i: (0, 0))],
        out_specs=(pl.BlockSpec((1, 1), lambda i: (0, 0)),
                   pl.BlockSpec((1, 1), lambda i: (0, 0)),
                   pl.BlockSpec((1, 1), lambda i: (0, 0))),
    )(logits2d, labels2d, src, tgt, isz)


# ============================ host-side matching ==============================
def _exact_linear_sum_assignment(cost):
    # TODO(synk): scipy.optimize.linear_sum_assignment (Hungarian) has no Pallas
    # equivalent; exact minimum-cost assignment via brute-force enumeration on
    # host (number of targets per image is tiny here).
    n, t = cost.shape
    cols = list(range(t))
    best_rows, best_val = None, np.inf
    for rows in itertools.permutations(range(n), t):
        v = cost[list(rows), cols].sum()
        if v < best_val:
            best_val, best_rows = v, rows
    rows = np.asarray(best_rows, dtype=np.int64)
    col_arr = np.arange(t, dtype=np.int64)
    order = np.argsort(rows)            # scipy returns row-sorted indices
    return rows[order], col_arr[order]


def _pad_axis(x, axis, size, value=0.0):
    pad = size - x.shape[axis]
    if pad <= 0:
        return x
    widths = [(0, 0)] * x.ndim
    widths[axis] = (0, pad)
    return jnp.pad(x, widths, constant_values=value)


# ============================= Loss.forward ===================================
def sparse_rcnn_loss(outputs, targets):
    """Equivalent of Loss.forward(output, targets) -> loss_dict (focal path)."""
    pred_logits = outputs['pred_logits'].astype(jnp.float32)   # [B, N, C]
    pred_boxes  = outputs['pred_boxes'].astype(jnp.float32)    # [B, N, 4] abs xyxy
    B, N, C = pred_logits.shape
    T = targets[0]['labels'].shape[0]               # fixed per-image target count here

    N_pad = max(128, ((N + 127) // 128) * 128)      # lane-dense proposal axis
    T_pad = max(8, ((T + 7) // 8) * 8)              # sublane-aligned target axis

    tgt_labels = jnp.stack([t['labels'] for t in targets])                # [B, T]
    tgt_boxes  = jnp.stack([t['boxes_xyxy'] for t in targets])            # [B, T, 4]
    isize_out  = jnp.stack([t['image_size_xyxy'] for t in targets])       # [B, 4]
    isize_tgt  = jnp.stack([t['image_size_xyxy_tgt'] for t in targets])   # [B, T, 4]

    # ---- transposed / padded matcher inputs (proposals on the lane axis) ----
    logits_t = _pad_axis(jnp.transpose(pred_logits, (0, 2, 1)), 2, N_pad)           # [B, C, Np]
    pb_t     = _pad_axis(jnp.transpose(pred_boxes, (0, 2, 1)), 2, N_pad)            # [B, 4, Np]
    pbn_t    = _pad_axis(jnp.transpose(pred_boxes / isize_out[:, None, :], (0, 2, 1)),
                         2, N_pad)                                                   # [B, 4, Np]
    onehot   = _pad_axis(jax.nn.one_hot(tgt_labels, C, dtype=jnp.float32), 1, T_pad) # [B, Tp, C]
    tbox     = _pad_axis(tgt_boxes, 1, T_pad)                                        # [B, Tp, 4]
    tboxn    = _pad_axis(tgt_boxes / isize_tgt, 1, T_pad)                            # [B, Tp, 4]

    # ----- HungarianMatcher: cost matrix on TPU, assignment on host -----------
    cost = compute_cost_matrices(logits_t, pb_t, pbn_t, onehot, tbox, tboxn)  # [B, Tp, Np]
    cost_np = np.asarray(jax.device_get(cost))[:, :T, :N]
    indices = [_exact_linear_sum_assignment(cost_np[b].T) for b in range(B)]

    # flat matched indices (tiny; built once on host, gathers done on device)
    flat_src = np.concatenate([b * N + np.asarray(i) for b, (i, _) in enumerate(indices)])
    flat_tgt = np.concatenate([b * T + np.asarray(j) for b, (_, j) in enumerate(indices)])
    flat_src_j = jnp.asarray(flat_src, jnp.int32)
    flat_tgt_j = jnp.asarray(flat_tgt, jnp.int32)

    # ----- SetCriterion.loss_labels: one-hot targets via one device scatter ---
    cls_m = tgt_labels.reshape(B * T)[flat_tgt_j]                                  # [P]
    labels_onehot = jnp.zeros((B * N, C), jnp.float32).at[flat_src_j, cls_m].set(1.0)

    # lane-dense (R, 128) views for the focal loss; padding contributes 0 loss
    logits_flat = pred_logits.reshape(-1)
    labels_flat = labels_onehot.reshape(-1)
    pad = (-logits_flat.shape[0]) % 128
    if pad:
        logits_flat = jnp.concatenate([logits_flat,
                                       jnp.full((pad,), -1e4, jnp.float32)])
        labels_flat = jnp.concatenate([labels_flat, jnp.zeros((pad,), jnp.float32)])
    logits2d = logits_flat.reshape(-1, 128)
    labels2d = labels_flat.reshape(-1, 128)

    # ----- SetCriterion.loss_boxes inputs: single device gathers --------------
    src_boxes   = pred_boxes.reshape(B * N, 4)[flat_src_j]
    tgt_boxes_m = tgt_boxes.reshape(B * T, 4)[flat_tgt_j]
    isz_m       = isize_tgt.reshape(B * T, 4)[flat_tgt_j]

    # ----- fused loss kernel (focal sum + matched L1/GIoU sums) ---------------
    focal_sum, giou_sum, l1_sum = criterion_losses(logits2d, labels2d,
                                                   src_boxes, tgt_boxes_m, isz_m)

    num_boxes = float(max(sum(int(t['labels'].shape[0]) for t in targets), 1))

    return {'loss_ce':   focal_sum[0, 0] / num_boxes,
            'loss_bbox': l1_sum[0, 0] / num_boxes,
            'loss_giou': giou_sum[0, 0] / num_boxes}


# ================================== main ======================================
if __name__ == "__main__":
    key = jax.random.PRNGKey(0)
    B, N, C, T = 2, 16, NUM_CLASSES, 4          # batch, proposals, classes, targets/image
    W, H = 64.0, 48.0
    img_size = jnp.asarray([W, H, W, H], jnp.float32)

    def random_xyxy(k, n):
        k1, k2 = jax.random.split(k)
        cxcy = (jax.random.uniform(k1, (n, 2), jnp.float32) * jnp.asarray([W, H]) * 0.8
                + jnp.asarray([W, H]) * 0.1)
        wh = jax.random.uniform(k2, (n, 2), jnp.float32) * 12.0 + 4.0
        return jnp.concatenate([cxcy - wh / 2.0, cxcy + wh / 2.0], axis=-1)

    keys = jax.random.split(key, 8)
    pred_logits = jax.random.normal(keys[0], (B, N, C), jnp.float32)
    pred_boxes = jnp.stack([random_xyxy(keys[1 + b], N) for b in range(B)])   # [B, N, 4]

    targets = []
    for b in range(B):
        kb1, kb2 = jax.random.split(keys[4 + b])
        boxes_xyxy = random_xyxy(kb1, T)
        cxcywh = jnp.concatenate([(boxes_xyxy[:, :2] + boxes_xyxy[:, 2:]) / 2.0,
                                  boxes_xyxy[:, 2:] - boxes_xyxy[:, :2]], -1) / img_size
        targets.append({
            'labels': jax.random.randint(kb2, (T,), 0, C, jnp.int32),
            'boxes': cxcywh,                                   # normalized cxcywh
            'boxes_xyxy': boxes_xyxy,                          # absolute xyxy
            'image_size_xyxy': img_size,
            'image_size_xyxy_tgt': jnp.tile(img_size[None, :], (T, 1)),
        })

    output = {'pred_logits': pred_logits, 'pred_boxes': pred_boxes}
    loss_dict = sparse_rcnn_loss(output, targets)
    loss_dict = {k: jax.block_until_ready(v) for k, v in loss_dict.items()}
    assert all(bool(jnp.isfinite(v)) for v in loss_dict.values())
    print("KERNEL_OK")
</pallas_src>

<mosaic_0001>
module attributes {stable_mosaic.version = 11 : i64} {
  func.func @cost_matrix_kernel(%arg0: i32, %arg1: memref<1x8x128xf32, #tpu.memory_space<vmem>>, %arg2: memref<1x4x128xf32, #tpu.memory_space<vmem>>, %arg3: memref<1x4x128xf32, #tpu.memory_space<vmem>>, %arg4: memref<1x8x8xf32, #tpu.memory_space<vmem>>, %arg5: memref<1x8x4xf32, #tpu.memory_space<vmem>>, %arg6: memref<1x8x4xf32, #tpu.memory_space<vmem>>, %arg7: memref<1x8x128xf32, #tpu.memory_space<vmem>>) attributes {dimension_semantics = [#tpu.dimension_semantics<parallel>], iteration_bounds = array<i64: 2>, scalar_prefetch = 0 : i64, scratch_operands = 0 : i64, tpu.core_type = #tpu.core_type<tc>, window_params = [{transform_indices = @transform_0, window_bounds = array<i64: 1, 8, 128>}, {transform_indices = @transform_1, window_bounds = array<i64: 1, 4, 128>}, {transform_indices = @transform_2, window_bounds = array<i64: 1, 4, 128>}, {transform_indices = @transform_3, window_bounds = array<i64: 1, 8, 8>}, {transform_indices = @transform_4, window_bounds = array<i64: 1, 8, 4>}, {transform_indices = @transform_5, window_bounds = array<i64: 1, 8, 4>}, {transform_indices = @transform_6, window_bounds = array<i64: 1, 8, 128>}]} {
    %c0 = arith.constant 0 : index
    %c0_0 = arith.constant 0 : index
    %c0_1 = arith.constant 0 : index
    %0 = vector.load %arg1[%c0, %c0_0, %c0_1] : memref<1x8x128xf32, #tpu.memory_space<vmem>>, vector<1x8x128xf32>
    %1 = vector.shape_cast %0 : vector<1x8x128xf32> to vector<8x128xf32>
    %c0_2 = arith.constant 0 : index
    %c0_3 = arith.constant 0 : index
    %c0_4 = arith.constant 0 : index
    %2 = vector.load %arg2[%c0_2, %c0_3, %c0_4] : memref<1x4x128xf32, #tpu.memory_space<vmem>>, vector<1x4x128xf32>
    %3 = vector.shape_cast %2 : vector<1x4x128xf32> to vector<4x128xf32>
    %c0_5 = arith.constant 0 : index
    %c0_6 = arith.constant 0 : index
    %c0_7 = arith.constant 0 : index
    %4 = vector.load %arg3[%c0_5, %c0_6, %c0_7] : memref<1x4x128xf32, #tpu.memory_space<vmem>>, vector<1x4x128xf32>
    %5 = vector.shape_cast %4 : vector<1x4x128xf32> to vector<4x128xf32>
    %c0_8 = arith.constant 0 : index
    %c0_9 = arith.constant 0 : index
    %c0_10 = arith.constant 0 : index
    %6 = vector.load %arg4[%c0_8, %c0_9, %c0_10] : memref<1x8x8xf32, #tpu.memory_space<vmem>>, vector<1x8x8xf32>
    %7 = vector.shape_cast %6 : vector<1x8x8xf32> to vector<8x8xf32>
    %c0_11 = arith.constant 0 : index
    %c0_12 = arith.constant 0 : index
    %c0_13 = arith.constant 0 : index
    %8 = vector.load %arg5[%c0_11, %c0_12, %c0_13] : memref<1x8x4xf32, #tpu.memory_space<vmem>>, vector<1x8x4xf32>
    %9 = vector.shape_cast %8 : vector<1x8x4xf32> to vector<8x4xf32>
    %c0_14 = arith.constant 0 : index
    %c0_15 = arith.constant 0 : index
    %c0_16 = arith.constant 0 : index
    %10 = vector.load %arg6[%c0_14, %c0_15, %c0_16] : memref<1x8x4xf32, #tpu.memory_space<vmem>>, vector<1x8x4xf32>
    %11 = vector.shape_cast %10 : vector<1x8x4xf32> to vector<8x4xf32>
    %12 = arith.negf %1 : vector<8x128xf32>
    %13 = math.exp %12 : vector<8x128xf32>
    %cst = arith.constant 1.000000e+00 : f32
    %14 = vector.broadcast %cst : f32 to vector<8x128xf32>
    %15 = arith.addf %14, %13 : vector<8x128xf32>
    %16 = arith.divf %14, %15 : vector<8x128xf32>
    %cst_17 = arith.constant 0.000000e+00 : f32
    %17 = vector.broadcast %cst_17 : f32 to vector<8x128xf32>
    %18 = arith.maximumf %1, %17 : vector<8x128xf32>
    %19 = math.absf %1 : vector<8x128xf32>
    %cst_18 = arith.constant 0.000000e+00 : f32
    %20 = vector.broadcast %cst_18 : f32 to vector<8x128xf32>
    %21 = arith.subf %20, %19 : vector<8x128xf32>
    %22 = math.exp %21 : vector<8x128xf32>
    %23 = math.log1p %22 : vector<8x128xf32>
    %24 = arith.addf %18, %23 : vector<8x128xf32>
    %25 = arith.mulf %16, %16 : vector<8x128xf32>
    %cst_19 = arith.constant 7.500000e-01 : f32
    %26 = vector.broadcast %cst_19 : f32 to vector<8x128xf32>
    %27 = arith.mulf %26, %25 : vector<8x128xf32>
    %28 = arith.mulf %27, %24 : vector<8x128xf32>
    %cst_20 = arith.constant 1.000000e+00 : f32
    %29 = vector.broadcast %cst_20 : f32 to vector<8x128xf32>
    %30 = arith.subf %29, %16 : vector<8x128xf32>
    %cst_21 = arith.constant 1.000000e+00 : f32
    %31 = vector.broadcast %cst_21 : f32 to vector<8x128xf32>
    %32 = arith.subf %31, %16 : vector<8x128xf32>
    %33 = arith.mulf %30, %32 : vector<8x128xf32>
    %cst_22 = arith.constant 2.500000e-01 : f32
    %34 = vector.broadcast %cst_22 : f32 to vector<8x128xf32>
    %35 = arith.mulf %34, %33 : vector<8x128xf32>
    %36 = arith.subf %24, %1 : vector<8x128xf32>
    %37 = arith.mulf %35, %36 : vector<8x128xf32>
    %38 = arith.subf %37, %28 : vector<8x128xf32>
    %cst_23 = arith.constant dense<0.000000e+00> : vector<8x128xf32>
    %39 = tpu.matmul %7, %38, %cst_23 {dimension_numbers = #tpu.dot_dimension_numbers<[1], [0], [0], [1], [0, 0, 1, 1], [], []>} : vector<8x8xf32>, vector<8x128xf32>, vector<8x128xf32> -> vector<8x128xf32>
    %40 = vector.extract_strided_slice %5 {offsets = [0, 0], sizes = [1, 128], strides = [1, 1]} : vector<4x128xf32> to vector<1x128xf32>
    %41 = vector.extract_strided_slice %11 {offsets = [0, 0], sizes = [8, 1], strides = [1, 1]} : vector<8x4xf32> to vector<8x1xf32>
    %42 = vector.broadcast %40 : vector<1x128xf32> to vector<8x128xf32>
    %43 = vector.broadcast %41 : vector<8x1xf32> to vector<8x128xf32>
    %44 = arith.subf %42, %43 : vector<8x128xf32>
    %45 = math.absf %44 : vector<8x128xf32>
    %46 = vector.extract_strided_slice %5 {offsets = [1, 0], sizes = [1, 128], strides = [1, 1]} : vector<4x128xf32> to vector<1x128xf32>
    %47 = vector.extract_strided_slice %11 {offsets = [0, 1], sizes = [8, 1], strides = [1, 1]} : vector<8x4xf32> to vector<8x1xf32>
    %48 = vector.broadcast %46 : vector<1x128xf32> to vector<8x128xf32>
    %49 = vector.broadcast %47 : vector<8x1xf32> to vector<8x128xf32>
    %50 = arith.subf %48, %49 : vector<8x128xf32>
    %51 = math.absf %50 : vector<8x128xf32>
    %52 = arith.addf %45, %51 : vector<8x128xf32>
    %53 = vector.extract_strided_slice %5 {offsets = [2, 0], sizes = [1, 128], strides = [1, 1]} : vector<4x128xf32> to vector<1x128xf32>
    %54 = vector.extract_strided_slice %11 {offsets = [0, 2], sizes = [8, 1], strides = [1, 1]} : vector<8x4xf32> to vector<8x1xf32>
    %55 = vector.broadcast %53 : vector<1x128xf32> to vector<8x128xf32>
    %56 = vector.broadcast %54 : vector<8x1xf32> to vector<8x128xf32>
    %57 = arith.subf %55, %56 : vector<8x128xf32>
    %58 = math.absf %57 : vector<8x128xf32>
    %59 = arith.addf %52, %58 : vector<8x128xf32>
    %60 = vector.extract_strided_slice %5 {offsets = [3, 0], sizes = [1, 128], strides = [1, 1]} : vector<4x128xf32> to vector<1x128xf32>
    %61 = vector.extract_strided_slice %11 {offsets = [0, 3], sizes = [8, 1], strides = [1, 1]} : vector<8x4xf32> to vector<8x1xf32>
    %62 = vector.broadcast %60 : vector<1x128xf32> to vector<8x128xf32>
    %63 = vector.broadcast %61 : vector<8x1xf32> to vector<8x128xf32>
    %64 = arith.subf %62, %63 : vector<8x128xf32>
    %65 = math.absf %64 : vector<8x128xf32>
    %66 = arith.addf %59, %65 : vector<8x128xf32>
    %67 = vector.extract_strided_slice %3 {offsets = [2, 0], sizes = [1, 128], strides = [1, 1]} : vector<4x128xf32> to vector<1x128xf32>
    %68 = vector.extract_strided_slice %3 {offsets = [0, 0], sizes = [1, 128], strides = [1, 1]} : vector<4x128xf32> to vector<1x128xf32>
    %69 = arith.subf %67, %68 : vector<1x128xf32>
    %70 = vector.extract_strided_slice %3 {offsets = [3, 0], sizes = [1, 128], strides = [1, 1]} : vector<4x128xf32> to vector<1x128xf32>
    %71 = vector.extract_strided_slice %3 {offsets = [1, 0], sizes = [1, 128], strides = [1, 1]} : vector<4x128xf32> to vector<1x128xf32>
    %72 = arith.subf %70, %71 : vector<1x128xf32>
    %73 = arith.mulf %69, %72 : vector<1x128xf32>
    %74 = vector.extract_strided_slice %9 {offsets = [0, 2], sizes = [8, 1], strides = [1, 1]} : vector<8x4xf32> to vector<8x1xf32>
    %75 = vector.extract_strided_slice %9 {offsets = [0, 0], sizes = [8, 1], strides = [1, 1]} : vector<8x4xf32> to vector<8x1xf32>
    %76 = arith.subf %74, %75 : vector<8x1xf32>
    %77 = vector.extract_strided_slice %9 {offsets = [0, 3], sizes = [8, 1], strides = [1, 1]} : vector<8x4xf32> to vector<8x1xf32>
    %78 = vector.extract_strided_slice %9 {offsets = [0, 1], sizes = [8, 1], strides = [1, 1]} : vector<8x4xf32> to vector<8x1xf32>
    %79 = arith.subf %77, %78 : vector<8x1xf32>
    %80 = arith.mulf %76, %79 : vector<8x1xf32>
    %81 = vector.extract_strided_slice %3 {offsets = [0, 0], sizes = [1, 128], strides = [1, 1]} : vector<4x128xf32> to vector<1x128xf32>
    %82 = vector.extract_strided_slice %9 {offsets = [0, 0], sizes = [8, 1], strides = [1, 1]} : vector<8x4xf32> to vector<8x1xf32>
    %83 = vector.broadcast %81 : vector<1x128xf32> to vector<8x128xf32>
    %84 = vector.broadcast %82 : vector<8x1xf32> to vector<8x128xf32>
    %85 = arith.maximumf %83, %84 : vector<8x128xf32>
    %86 = vector.extract_strided_slice %3 {offsets = [1, 0], sizes = [1, 128], strides = [1, 1]} : vector<4x128xf32> to vector<1x128xf32>
    %87 = vector.extract_strided_slice %9 {offsets = [0, 1], sizes = [8, 1], strides = [1, 1]} : vector<8x4xf32> to vector<8x1xf32>
    %88 = vector.broadcast %86 : vector<1x128xf32> to vector<8x128xf32>
    %89 = vector.broadcast %87 : vector<8x1xf32> to vector<8x128xf32>
    %90 = arith.maximumf %88, %89 : vector<8x128xf32>
    %91 = vector.extract_strided_slice %3 {offsets = [2, 0], sizes = [1, 128], strides = [1, 1]} : vector<4x128xf32> to vector<1x128xf32>
    %92 = vector.extract_strided_slice %9 {offsets = [0, 2], sizes = [8, 1], strides = [1, 1]} : vector<8x4xf32> to vector<8x1xf32>
    %93 = vector.broadcast %91 : vector<1x128xf32> to vector<8x128xf32>
    %94 = vector.broadcast %92 : vector<8x1xf32> to vector<8x128xf32>
    %95 = arith.minimumf %93, %94 : vector<8x128xf32>
    %96 = vector.extract_strided_slice %3 {offsets = [3, 0], sizes = [1, 128], strides = [1, 1]} : vector<4x128xf32> to vector<1x128xf32>
    %97 = vector.extract_strided_slice %9 {offsets = [0, 3], sizes = [8, 1], strides = [1, 1]} : vector<8x4xf32> to vector<8x1xf32>
    %98 = vector.broadcast %96 : vector<1x128xf32> to vector<8x128xf32>
    %99 = vector.broadcast %97 : vector<8x1xf32> to vector<8x128xf32>
    %100 = arith.minimumf %98, %99 : vector<8x128xf32>
    %101 = arith.subf %95, %85 : vector<8x128xf32>
    %cst_24 = arith.constant 0.000000e+00 : f32
    %102 = vector.broadcast %cst_24 : f32 to vector<8x128xf32>
    %103 = arith.maximumf %101, %102 : vector<8x128xf32>
    %104 = arith.subf %100, %90 : vector<8x128xf32>
    %cst_25 = arith.constant 0.000000e+00 : f32
    %105 = vector.broadcast %cst_25 : f32 to vector<8x128xf32>
    %106 = arith.maximumf %104, %105 : vector<8x128xf32>
    %107 = arith.mulf %103, %106 : vector<8x128xf32>
    %108 = vector.broadcast %73 : vector<1x128xf32> to vector<8x128xf32>
    %109 = vector.broadcast %80 : vector<8x1xf32> to vector<8x128xf32>
    %110 = arith.addf %108, %109 : vector<8x128xf32>
    %111 = arith.subf %110, %107 : vector<8x128xf32>
    %cst_26 = arith.constant 1.000000e-07 : f32
    %112 = vector.broadcast %cst_26 : f32 to vector<8x128xf32>
    %113 = arith.addf %111, %112 : vector<8x128xf32>
    %114 = tpu.reciprocal %113 {approx = true} : vector<8x128xf32> -> vector<8x128xf32>
    %115 = arith.mulf %107, %114 : vector<8x128xf32>
    %116 = vector.extract_strided_slice %3 {offsets = [0, 0], sizes = [1, 128], strides = [1, 1]} : vector<4x128xf32> to vector<1x128xf32>
    %117 = vector.extract_strided_slice %9 {offsets = [0, 0], sizes = [8, 1], strides = [1, 1]} : vector<8x4xf32> to vector<8x1xf32>
    %118 = vector.broadcast %116 : vector<1x128xf32> to vector<8x128xf32>
    %119 = vector.broadcast %117 : vector<8x1xf32> to vector<8x128xf32>
    %120 = arith.minimumf %118, %119 : vector<8x128xf32>
    %121 = vector.extract_strided_slice %3 {offsets = [1, 0], sizes = [1, 128], strides = [1, 1]} : vector<4x128xf32> to vector<1x128xf32>
    %122 = vector.extract_strided_slice %9 {offsets = [0, 1], sizes = [8, 1], strides = [1, 1]} : vector<8x4xf32> to vector<8x1xf32>
    %123 = vector.broadcast %121 : vector<1x128xf32> to vector<8x128xf32>
    %124 = vector.broadcast %122 : vector<8x1xf32> to vector<8x128xf32>
    %125 = arith.minimumf %123, %124 : vector<8x128xf32>
    %126 = vector.extract_strided_slice %3 {offsets = [2, 0], sizes = [1, 128], strides = [1, 1]} : vector<4x128xf32> to vector<1x128xf32>
    %127 = vector.extract_strided_slice %9 {offsets = [0, 2], sizes = [8, 1], strides = [1, 1]} : vector<8x4xf32> to vector<8x1xf32>
    %128 = vector.broadcast %126 : vector<1x128xf32> to vector<8x128xf32>
    %129 = vector.broadcast %127 : vector<8x1xf32> to vector<8x128xf32>
    %130 = arith.maximumf %128, %129 : vector<8x128xf32>
    %131 = vector.extract_strided_slice %3 {offsets = [3, 0], sizes = [1, 128], strides = [1, 1]} : vector<4x128xf32> to vector<1x128xf32>
    %132 = vector.extract_strided_slice %9 {offsets = [0, 3], sizes = [8, 1], strides = [1, 1]} : vector<8x4xf32> to vector<8x1xf32>
    %133 = vector.broadcast %131 : vector<1x128xf32> to vector<8x128xf32>
    %134 = vector.broadcast %132 : vector<8x1xf32> to vector<8x128xf32>
    %135 = arith.maximumf %133, %134 : vector<8x128xf32>
    %136 = arith.subf %130, %120 : vector<8x128xf32>
    %cst_27 = arith.constant 0.000000e+00 : f32
    %137 = vector.broadcast %cst_27 : f32 to vector<8x128xf32>
    %138 = arith.maximumf %136, %137 : vector<8x128xf32>
    %139 = arith.subf %135, %125 : vector<8x128xf32>
    %cst_28 = arith.constant 0.000000e+00 : f32
    %140 = vector.broadcast %cst_28 : f32 to vector<8x128xf32>
    %141 = arith.maximumf %139, %140 : vector<8x128xf32>
    %142 = arith.mulf %138, %141 : vector<8x128xf32>
    %143 = arith.subf %142, %111 : vector<8x128xf32>
    %cst_29 = arith.constant 1.000000e-07 : f32
    %144 = vector.broadcast %cst_29 : f32 to vector<8x128xf32>
    %145 = arith.addf %142, %144 : vector<8x128xf32>
    %146 = tpu.reciprocal %145 {approx = true} : vector<8x128xf32> -> vector<8x128xf32>
    %147 = arith.mulf %143, %146 : vector<8x128xf32>
    %148 = arith.subf %115, %147 : vector<8x128xf32>
    %cst_30 = arith.constant 5.000000e+00 : f32
    %149 = vector.broadcast %cst_30 : f32 to vector<8x128xf32>
    %150 = arith.mulf %149, %66 : vector<8x128xf32>
    %cst_31 = arith.constant 2.000000e+00 : f32
    %151 = vector.broadcast %cst_31 : f32 to vector<8x128xf32>
    %152 = arith.mulf %151, %39 : vector<8x128xf32>
    %153 = arith.addf %150, %152 : vector<8x128xf32>
    %cst_32 = arith.constant 2.000000e+00 : f32
    %154 = vector.broadcast %cst_32 : f32 to vector<8x128xf32>
    %155 = arith.mulf %154, %148 : vector<8x128xf32>
    %156 = arith.subf %153, %155 : vector<8x128xf32>
    %c0_33 = arith.constant 0 : index
    %c0_34 = arith.constant 0 : index
    %c0_35 = arith.constant 0 : index
    %157 = vector.load %arg7[%c0_33, %c0_34, %c0_35] : memref<1x8x128xf32, #tpu.memory_space<vmem>>, vector<1x8x128xf32>
    %158 = vector.shape_cast %157 : vector<1x8x128xf32> to vector<8x128xf32>
    %159 = vector.shape_cast %156 : vector<8x128xf32> to vector<1x8x128xf32>
    tpu.vector_store %arg7[%c0_33, %c0_34, %c0_35], %159 {strides = array<i32>} : memref<1x8x128xf32, #tpu.memory_space<vmem>>, vector<1x8x128xf32>,
    return
  }
  func.func @transform_0(%arg0: i32) -> (i32, i32, i32) {
    %c0_i32 = arith.constant 0 : i32
    %c0_i32_0 = arith.constant 0 : i32
    %c0_i32_1 = arith.constant 0 : i32
    return %arg0, %c0_i32, %c0_i32_0 : i32, i32, i32
  }
  func.func @transform_1(%arg0: i32) -> (i32, i32, i32) {
    %c0_i32 = arith.constant 0 : i32
    %c0_i32_0 = arith.constant 0 : i32
    %c0_i32_1 = arith.constant 0 : i32
    return %arg0, %c0_i32, %c0_i32_0 : i32, i32, i32
  }
  func.func @transform_2(%arg0: i32) -> (i32, i32, i32) {
    %c0_i32 = arith.constant 0 : i32
    %c0_i32_0 = arith.constant 0 : i32
    %c0_i32_1 = arith.constant 0 : i32
    return %arg0, %c0_i32, %c0_i32_0 : i32, i32, i32
  }
  func.func @transform_3(%arg0: i32) -> (i32, i32, i32) {
    %c0_i32 = arith.constant 0 : i32
    %c0_i32_0 = arith.constant 0 : i32
    %c0_i32_1 = arith.constant 0 : i32
    return %arg0, %c0_i32, %c0_i32_0 : i32, i32, i32
  }
  func.func @transform_4(%arg0: i32) -> (i32, i32, i32) {
    %c0_i32 = arith.constant 0 : i32
    %c0_i32_0 = arith.constant 0 : i32
    %c0_i32_1 = arith.constant 0 : i32
    return %arg0, %c0_i32, %c0_i32_0 : i32, i32, i32
  }
  func.func @transform_5(%arg0: i32) -> (i32, i32, i32) {
    %c0_i32 = arith.constant 0 : i32
    %c0_i32_0 = arith.constant 0 : i32
    %c0_i32_1 = arith.constant 0 : i32
    return %arg0, %c0_i32, %c0_i32_0 : i32, i32, i32
  }
  func.func @transform_6(%arg0: i32) -> (i32, i32, i32) {
    %c0_i32 = arith.constant 0 : i32
    %c0_i32_0 = arith.constant 0 : i32
    %c0_i32_1 = arith.constant 0 : i32
    return %arg0, %c0_i32, %c0_i32_0 : i32, i32, i32
  }
}

</mosaic_0001>

<llo_original>
// kernel: tpu_custom_call.1
$region0: #{tpu_custom_call.1}
  #allocation0 [shape = 'u32[]', space=smem, size = 0x4, offset = 0x4, fixed_abs, tag = 'smem constant byte address 0x4 - core index']
  #allocation1 [shape = 'u32[144,128]{1,0:T(1,128)}', space=vmem, size = 0x12000, scoped, tag = 'internal scratch']
  %s0 = inlined_call_operand.vmem [shape: f32[2,8,128], index: 0, kind: input, shape index: {}]
  %s1 = inlined_call_operand.vmem [shape: f32[2,4,128], index: 1, kind: input, shape index: {}]
  %s2 = inlined_call_operand.hbm [shape: f32[2,4,128], index: 2, kind: input, shape index: {}]
  %s3 = inlined_call_operand.vmem [shape: f32[2,8,8], index: 3, kind: input, shape index: {}]
  %s4 = inlined_call_operand.vmem [shape: f32[2,8,4], index: 4, kind: input, shape index: {}]
  %s5 = inlined_call_operand.vmem [shape: f32[2,8,4], index: 5, kind: input, shape index: {}]
  %s6 = inlined_call_operand.hbm [shape: f32[2,8,128], index: 6, kind: output, shape index: {}]
  %s7 = sld [smem:[#allocation0]]
  $region61: #{tpu_custom_call.1} parent=0
    _
  %s9 = ssub.s32 1, %s7
  %s10 = scalar_select 0, %s9, %s7
  $region1: #{tpu_custom_call.1} parent=0
    #allocation2 [shape = 'u8[4096]{0}', space=vmem, size = 0x1000, scoped, tag = 'input window, operand 2']
    #allocation3 [shape = 's32[2]{0}', space=sflag, size = 0x8, scoped, tag = 'scoped memory for tpu_custom_call.1']
    #allocation4 [shape = 's32[2]{0}', space=sflag, size = 0x8, scoped, tag = 'scoped memory for tpu_custom_call.1']
    #allocation5 [shape = 'u8[8192]{0}', space=vmem, size = 0x2000, scoped, tag = 'output window, operand 0']
    %11 = vsyncpa [#allocation3], 0
    %s12 = scalar_lea.sflag [#allocation3], 1
    %13 = vsyncpa %s12, 0
    %14 = vsyncpa [#allocation4], 0
    %s15 = scalar_lea.sflag [#allocation4], 1
    %16 = vsyncpa %s15, 0
    loop: start=0, step=1, limit=4
    $region2: #{tpu_custom_call.1} parent=1 // loop_pre_header
      _
    $region3: #{tpu_custom_call.1} parent=1 // loop_header
      %s18 = sphi 0, %s22
      %p19 = scmp.ge.s32.totalorder %s18, 4
      %s28 = sphi 0, %s30
      %s31 = sphi 0, %s28
      %s32 = sphi 0, %s31
      %s48 = sphi 0, %s32
      %s54 = sphi 0, %s56
      %s57 = sphi 0, %s54
      %s58 = sphi 0, %s57
      %s74 = sphi 0, %s58
      %s80 = sphi 0, %s82
      %s83 = sphi 0, %s80
      %s84 = sphi 0, %s83
      %s100 = sphi 0, %s84
      %s106 = sphi 0, %s108
      %s109 = sphi 0, %s106
      %s110 = sphi 0, %s109
      %s126 = sphi 0, %s110
      %s132 = sphi 0, %s134
      %s135 = sphi 0, %s132
      %s136 = sphi 0, %s135
      %s152 = sphi 0, %s136
      %s158 = sphi 0, %s160
      %s161 = sphi 0, %s158
      %s162 = sphi 0, %s161
      %s178 = sphi 0, %s162
      %s184 = sphi 0, %s186
      %s187 = sphi 0, %s184
      %s188 = sphi 0, %s187
      %s204 = sphi 0, %s188
    $region4: #{tpu_custom_call.1} parent=1 // loop_header_branch
      %21 = sbr.rel (%p19) target = $region8
    $region5: #{tpu_custom_call.1} parent=1 // loop_body
      %s23 = ssub.s32 %s18, 1
      %s24 = ssub.s32 %s18, 2
      %s25 = sadd.s32 %s18, 1
      %s26 = ssub.s32 %s18, %s25
      %p27 = scmp.eq.s32.totalorder %s26, 0
      %s29 = sadd.s32 %s28, 1
      %s30 = scalar_select %p27, %s28, %s29
      %p33 = pneg %p27
      %p34 = scmp.eq.s32.totalorder %s18, 1
      %p35 = por %p33, %p34
      %p36 = scmp.ne.s32.totalorder %s28, %s31
      %p37 = scmp.eq.s32.totalorder %s18, 0
      %p38 = por %p36, %p37
      %p39 = scmp.ne.s32.totalorder %s28, %s31
      %p40 = scmp.eq.s32.totalorder %s23, 1
      %p41 = por %p39, %p40
      %p42 = scmp.ne.s32.totalorder %s31, %s32
      %p43 = scmp.eq.s32.totalorder %s23, 0
      %p44 = por %p42, %p43
      %p45 = scmp.ne.s32.totalorder %s31, %s32
      %p46 = scmp.eq.s32.totalorder %s24, 1
      %p47 = por %p45, %p46
      %p49 = scmp.ne.s32.totalorder %s32, %s48
      %p50 = scmp.eq.s32.totalorder %s24, 0
      %p51 = por %p49, %p50
      %s52 = ssub.s32 %s18, %s25
      %p53 = scmp.eq.s32.totalorder %s52, 0
      %s55 = sadd.s32 %s54, 1
      %s56 = scalar_select %p53, %s54, %s55
      %p59 = pneg %p53
      %p60 = scmp.eq.s32.totalorder %s18, 1
      %p61 = por %p59, %p60
      %p62 = scmp.ne.s32.totalorder %s54, %s57
      %p63 = scmp.eq.s32.totalorder %s18, 0
      %p64 = por %p62, %p63
      %p65 = scmp.ne.s32.totalorder %s54, %s57
      %p66 = scmp.eq.s32.totalorder %s23, 1
      %p67 = por %p65, %p66
      %p68 = scmp.ne.s32.totalorder %s57, %s58
      %p69 = scmp.eq.s32.totalorder %s23, 0
      %p70 = por %p68, %p69
      %p71 = scmp.ne.s32.totalorder %s57, %s58
      %p72 = scmp.eq.s32.totalorder %s24, 1
      %p73 = por %p71, %p72
      %p75 = scmp.ne.s32.totalorder %s58, %s74
      %p76 = scmp.eq.s32.totalorder %s24, 0
      %p77 = por %p75, %p76
      %s78 = ssub.s32 %s18, %s25
      %p79 = scmp.eq.s32.totalorder %s78, 0
      %s81 = sadd.s32 %s80, 1
      %s82 = scalar_select %p79, %s80, %s81
      %p85 = pneg %p79
      %p86 = scmp.eq.s32.totalorder %s18, 1
      %p87 = por %p85, %p86
      %p88 = scmp.ne.s32.totalorder %s80, %s83
      %p89 = scmp.eq.s32.totalorder %s18, 0
      %p90 = por %p88, %p89
      %p91 = scmp.ne.s32.totalorder %s80, %s83
      %p92 = scmp.eq.s32.totalorder %s23, 1
      %p93 = por %p91, %p92
      %p94 = scmp.ne.s32.totalorder %s83, %s84
      %p95 = scmp.eq.s32.totalorder %s23, 0
      %p96 = por %p94, %p95
      %p97 = scmp.ne.s32.totalorder %s83, %s84
      %p98 = scmp.eq.s32.totalorder %s24, 1
      %p99 = por %p97, %p98
      %p101 = scmp.ne.s32.totalorder %s84, %s100
      %p102 = scmp.eq.s32.totalorder %s24, 0
      %p103 = por %p101, %p102
      %s104 = ssub.s32 %s18, %s25
      %p105 = scmp.eq.s32.totalorder %s104, 0
      %s107 = sadd.s32 %s106, 1
      %s108 = scalar_select %p105, %s106, %s107
      %p111 = pneg %p105
      %p112 = scmp.eq.s32.totalorder %s18, 1
      %p113 = por %p111, %p112
      %p114 = scmp.ne.s32.totalorder %s106, %s109
      %p115 = scmp.eq.s32.totalorder %s18, 0
      %p116 = por %p114, %p115
      %p117 = scmp.ne.s32.totalorder %s106, %s109
      %p118 = scmp.eq.s32.totalorder %s23, 1
      %p119 = por %p117, %p118
      %p120 = scmp.ne.s32.totalorder %s109, %s110
      %p121 = scmp.eq.s32.totalorder %s23, 0
      %p122 = por %p120, %p121
      %p123 = scmp.ne.s32.totalorder %s109, %s110
      %p124 = scmp.eq.s32.totalorder %s24, 1
      %p125 = por %p123, %p124
      %p127 = scmp.ne.s32.totalorder %s110, %s126
      %p128 = scmp.eq.s32.totalorder %s24, 0
      %p129 = por %p127, %p128
      %s130 = ssub.s32 %s18, %s25
      %p131 = scmp.eq.s32.totalorder %s130, 0
      %s133 = sadd.s32 %s132, 1
      %s134 = scalar_select %p131, %s132, %s133
      %p137 = pneg %p131
      %p138 = scmp.eq.s32.totalorder %s18, 1
      %p139 = por %p137, %p138
      %p140 = scmp.ne.s32.totalorder %s132, %s135
      %p141 = scmp.eq.s32.totalorder %s18, 0
      %p142 = por %p140, %p141
      %p143 = scmp.ne.s32.totalorder %s132, %s135
      %p144 = scmp.eq.s32.totalorder %s23, 1
      %p145 = por %p143, %p144
      %p146 = scmp.ne.s32.totalorder %s135, %s136
      %p147 = scmp.eq.s32.totalorder %s23, 0
      %p148 = por %p146, %p147
      %p149 = scmp.ne.s32.totalorder %s135, %s136
      %p150 = scmp.eq.s32.totalorder %s24, 1
      %p151 = por %p149, %p150
      %p153 = scmp.ne.s32.totalorder %s136, %s152
      %p154 = scmp.eq.s32.totalorder %s24, 0
      %p155 = por %p153, %p154
      %s156 = ssub.s32 %s18, %s25
      %p157 = scmp.eq.s32.totalorder %s156, 0
      %s159 = sadd.s32 %s158, 1
      %s160 = scalar_select %p157, %s158, %s159
      %p163 = pneg %p157
      %p164 = scmp.eq.s32.totalorder %s18, 1
      %p165 = por %p163, %p164
      %p166 = scmp.ne.s32.totalorder %s158, %s161
      %p167 = scmp.eq.s32.totalorder %s18, 0
      %p168 = por %p166, %p167
      %p169 = scmp.ne.s32.totalorder %s158, %s161
      %p170 = scmp.eq.s32.totalorder %s23, 1
      %p171 = por %p169, %p170
      %p172 = scmp.ne.s32.totalorder %s161, %s162
      %p173 = scmp.eq.s32.totalorder %s23, 0
      %p174 = por %p172, %p173
      %p175 = scmp.ne.s32.totalorder %s161, %s162
      %p176 = scmp.eq.s32.totalorder %s24, 1
      %p177 = por %p175, %p176
      %p179 = scmp.ne.s32.totalorder %s162, %s178
      %p180 = scmp.eq.s32.totalorder %s24, 0
      %p181 = por %p179, %p180
      %s182 = ssub.s32 %s18, %s25
      %p183 = scmp.eq.s32.totalorder %s182, 0
      %s185 = sadd.s32 %s184, 1
      %s186 = scalar_select %p183, %s184, %s185
      %p189 = pneg %p183
      %p190 = scmp.eq.s32.totalorder %s18, 1
      %p191 = por %p189, %p190
      %p192 = scmp.ne.s32.totalorder %s184, %s187
      %p193 = scmp.eq.s32.totalorder %s18, 0
      %p194 = por %p192, %p193
      %p195 = scmp.ne.s32.totalorder %s184, %s187
      %p196 = scmp.eq.s32.totalorder %s23, 1
      %p197 = por %p195, %p196
      %p198 = scmp.ne.s32.totalorder %s187, %s188
      %p199 = scmp.eq.s32.totalorder %s23, 0
      %p200 = por %p198, %p199
      %p201 = scmp.ne.s32.totalorder %s187, %s188
      %p202 = scmp.eq.s32.totalorder %s24, 1
      %p203 = por %p201, %p202
      %p205 = scmp.ne.s32.totalorder %s188, %s204
      %p206 = scmp.eq.s32.totalorder %s24, 0
      %p207 = por %p205, %p206
      %p208 = scmp.le.s32.totalorder 1, %s18
      %p209 = scmp.lt.s32.totalorder %s18, 3
      %p210 = pnand %p208, %p209
      %p211 = pneg %p210
      // Predicated region
      $region9: #{tpu_custom_call.1} parent=5 // pred_check
        _
      $region10: #{tpu_custom_call.1} parent=5 // pred_check_branch
        %213 = sbr.rel (%p210) target = $region12
      $region11: #{tpu_custom_call.1} parent=5 // pred_region
        %s214 = ssub.s32 %s18, 1
      $region12: #{tpu_custom_call.1} parent=5 // pred_fallthru
        _
      %p215 = scmp.lt.s32.totalorder %s18, 2
      // Predicated region
      $region13: #{tpu_custom_call.1} parent=5 // pred_check
        %p216 = pneg %p215
      $region14: #{tpu_custom_call.1} parent=5 // pred_check_branch
        %218 = sbr.rel (%p216) target = $region16
      $region15: #{tpu_custom_call.1} parent=5 // pred_region
        // Predicated region
        $region17: #{tpu_custom_call.1} parent=15 // pred_check
          %p219 = pneg %p38
        $region18: #{tpu_custom_call.1} parent=15 // pred_check_branch
          %221 = sbr.rel (%p219) target = $region20
        $region19: #{tpu_custom_call.1} parent=15 // pred_region
          %p222 = scmp.lt.s32.totalorder %s18, 1
          %s223 = scalar_select %p222, %s18, 1
          %s224 = smul.addr %s223, 8
          %s225 = scalar_lea.vmem %s0, %s224
        $region20: #{tpu_custom_call.1} parent=15 // pred_fallthru
          _
        // Predicated region
        $region21: #{tpu_custom_call.1} parent=15 // pred_check
          %p226 = pneg %p64
        $region22: #{tpu_custom_call.1} parent=15 // pred_check_branch
          %228 = sbr.rel (%p226) target = $region24
        $region23: #{tpu_custom_call.1} parent=15 // pred_region
          %p229 = scmp.lt.s32.totalorder %s18, 1
          %s230 = scalar_select %p229, %s18, 1
          %s231 = smul.addr %s230, 4
          %s232 = scalar_lea.vmem %s1, %s231
        $region24: #{tpu_custom_call.1} parent=15 // pred_fallthru
          _
        // Predicated region
        $region25: #{tpu_custom_call.1} parent=15 // pred_check
          %p233 = pneg %p90
        $region26: #{tpu_custom_call.1} parent=15 // pred_check_branch
          %235 = sbr.rel (%p233) target = $region28
        $region27: #{tpu_custom_call.1} parent=15 // pred_region
          %s236 = sand.u32 %s80, 1
          %s237 = scalar_lea.sflag [#allocation3], %s236
          %s238 = sand.u32 %s80, 1
          %s239 = smul.addr %s238, 4
          %s240 = scalar_lea.vmem [#allocation2], %s239
          %s242 = ssub.s32 64, 64
          %243 = vsyncadd %s237, %s242
          %s244 = smul.addr %s18, 64
          %s245 = scalar_lea.hbm %s2, %s244
          %s247 = sshll.u32 %s240, 4
          %s248 = int_to_ptr.vmem [resolvable:$true] %s247
          %250 = dma.hbm_to_vmem [thread:$0]  %s245, 64, %s248, %s237
        $region28: #{tpu_custom_call.1} parent=15 // pred_fallthru
          _
        // Predicated region
        $region29: #{tpu_custom_call.1} parent=15 // pred_check
          %p251 = pneg %p116
        $region30: #{tpu_custom_call.1} parent=15 // pred_check_branch
          %253 = sbr.rel (%p251) target = $region32
        $region31: #{tpu_custom_call.1} parent=15 // pred_region
          %p254 = scmp.lt.s32.totalorder %s18, 1
          %s255 = scalar_select %p254, %s18, 1
          %s256 = smul.addr %s255, 8
          %s257 = scalar_lea.vmem %s3, %s256
        $region32: #{tpu_custom_call.1} parent=15 // pred_fallthru
          _
        // Predicated region
        $region33: #{tpu_custom_call.1} parent=15 // pred_check
          %p258 = pneg %p142
        $region34: #{tpu_custom_call.1} parent=15 // pred_check_branch
          %260 = sbr.rel (%p258) target = $region36
        $region35: #{tpu_custom_call.1} parent=15 // pred_region
          %p261 = scmp.lt.s32.totalorder %s18, 1
          %s262 = scalar_select %p261, %s18, 1
          %s263 = smul.addr %s262, 8
          %s264 = scalar_lea.vmem %s4, %s263
        $region36: #{tpu_custom_call.1} parent=15 // pred_fallthru
          _
        // Predicated region
        $region37: #{tpu_custom_call.1} parent=15 // pred_check
          %p265 = pneg %p168
        $region38: #{tpu_custom_call.1} parent=15 // pred_check_branch
          %267 = sbr.rel (%p265) target = $region40
        $region39: #{tpu_custom_call.1} parent=15 // pred_region
          %p268 = scmp.lt.s32.totalorder %s18, 1
          %s269 = scalar_select %p268, %s18, 1
          %s270 = smul.addr %s269, 8
          %s271 = scalar_lea.vmem %s5, %s270
        $region40: #{tpu_custom_call.1} parent=15 // pred_fallthru
          _
      $region16: #{tpu_custom_call.1} parent=5 // pred_fallthru
        _
      %p272 = scmp.le.s32.totalorder 1, %s18
      %p273 = scmp.lt.s32.totalorder %s18, 3
      %p274 = pnand %p272, %p273
      %p275 = pneg %p274
      // Predicated region
      $region41: #{tpu_custom_call.1} parent=5 // pred_check
        _
      $region42: #{tpu_custom_call.1} parent=5 // pred_check_branch
        %277 = sbr.rel (%p274) target = $region44
      $region43: #{tpu_custom_call.1} parent=5 // pred_region
        %s278 = ssub.s32 %s18, 1
        %s279 = sand.u32 %s83, 1
        %s280 = scalar_lea.sflag [#allocation3], %s279
        %s281 = sand.u32 %s83, 1
        %s282 = smul.addr %s281, 4
        %s283 = scalar_lea.vmem [#allocation2], %s282
        // Predicated region
        $region45: #{tpu_custom_call.1} parent=43 // pred_check
          %p284 = pneg %p96
        $region46: #{tpu_custom_call.1} parent=43 // pred_check_branch
          %286 = sbr.rel (%p284) target = $region48
        $region47: #{tpu_custom_call.1} parent=43 // pred_region
          %287 = dma.done %s280, 64
        $region48: #{tpu_custom_call.1} parent=43 // pred_fallthru
          _
        %p288 = scmp.lt.s32.totalorder %s23, 1
        %s289 = scalar_select %p288, %s23, 1
        %s290 = smul.addr %s289, 8
        %s291 = scalar_lea.vmem %s0, %s290
        %p292 = pneg %p44
        %p293 = pneg %p41
        %p294 = scmp.lt.s32.totalorder %s23, 1
        %s295 = scalar_select %p294, %s23, 1
        %s296 = smul.addr %s295, 4
        %s297 = scalar_lea.vmem %s1, %s296
        %p298 = pneg %p70
        %p299 = pneg %p67
        %s300 = sand.u32 %s83, 1
        %s301 = scalar_lea.sflag [#allocation3], %s300
        %s302 = sand.u32 %s83, 1
        %s303 = smul.addr %s302, 4
        %s304 = scalar_lea.vmem [#allocation2], %s303
        %p305 = pneg %p96
        %p306 = pneg %p93
        %p307 = scmp.lt.s32.totalorder %s23, 1
        %s308 = scalar_select %p307, %s23, 1
        %s309 = smul.addr %s308, 8
        %s310 = scalar_lea.vmem %s3, %s309
        %p311 = pneg %p122
        %p312 = pneg %p119
        %p313 = scmp.lt.s32.totalorder %s23, 1
        %s314 = scalar_select %p313, %s23, 1
        %s315 = smul.addr %s314, 8
        %s316 = scalar_lea.vmem %s4, %s315
        %p317 = pneg %p148
        %p318 = pneg %p145
        %p319 = scmp.lt.s32.totalorder %s23, 1
        %s320 = scalar_select %p319, %s23, 1
        %s321 = smul.addr %s320, 8
        %s322 = scalar_lea.vmem %s5, %s321
        %p323 = pneg %p174
        %p324 = pneg %p171
        %p325 = pneg %p200
        %p326 = pneg %p197
        %s327 = sand.u32 %s187, 1
        %s328 = scalar_lea.sflag [#allocation4], %s327
        %s329 = sand.u32 %s187, 1
        %s330 = smul.addr %s329, 8
        %s331 = scalar_lea.vmem [#allocation5], %s330
        %p332 = scmp.lt.s32.totalorder %s23, 1
        %s333 = scalar_select %p332, %s23, 1
        %s334 = smul.addr %s333, 8
        %s335 = scalar_lea.vmem %s0, %s334
        %p336 = scmp.lt.s32.totalorder %s23, 1
        %s337 = scalar_select %p336, %s23, 1
        %s338 = smul.addr %s337, 4
        %s339 = scalar_lea.vmem %s1, %s338
        %p340 = scmp.lt.s32.totalorder %s23, 1
        %s341 = scalar_select %p340, %s23, 1
        %s342 = smul.addr %s341, 8
        %s343 = scalar_lea.vmem %s3, %s342
        %p344 = scmp.lt.s32.totalorder %s23, 1
        %s345 = scalar_select %p344, %s23, 1
        %s346 = smul.addr %s345, 8
        %s347 = scalar_lea.vmem %s4, %s346
        %p348 = scmp.lt.s32.totalorder %s23, 1
        %s349 = scalar_select %p348, %s23, 1
        %s350 = smul.addr %s349, 8
        %s351 = scalar_lea.vmem %s5, %s350
        %v352 = vld [vmem:[%s335] sm:$0xff]
        %v353 = vld [vmem:[%s339] sm:$0xf]
        %v354 = vld [vmem:[%s283] sm:$0xf]
        %v355 = vld [vmem:[%s343] sm:$0xff]
        %v356 = vld [vmem:[%s347] sm:$0xff]
        %v357 = vld [vmem:[%s351] sm:$0xff]
        %v358 = vxor.u32 %v352, 2147483648
        %v359 = vmul.f32 %v358, 1.442695
        %v360 = vpow.pop %v359
        %v361 = vadd.f32 %v360, 1.0
        %v362 = vrcp.pop %v361
        %v363 = vmul.f32 1.0, %v362
        %v364 = vmax.f32 %v352, 0.0
        %v365 = vand.u32 2147483647, %v352
        %v366 = vsub.f32 0.0, %v365
        %v367 = vmul.f32 %v366, 1.442695
        %v368 = vpow.pop %v367
        %v369 = vadd.f32 %v368, 1.0
        %v370 = vlog2.pop %v369
        %v371 = vmul.f32 %v370, 0.6931472
        %v372 = vmul.f32 -0.5, %v368
        %v373 = vadd.f32 %v372, 1.0
        %v374 = vmul.f32 %v373, %v368
        %v375 = vand.u32 2147483647, %v368
        %vm376 = vcmp.lt.f32.partialorder %v375, 0.0004427343
        %v377 = vsel %vm376, %v374, %v371
        %v378 = vadd.f32 %v364, %v377
        %v379 = vmul.f32 %v363, %v363
        %v380 = vmul.f32 %v379, 0.75
        %v381 = vmul.f32 %v380, %v378
        %v382 = vsub.f32 1.0, %v363
        %v383 = vmul.f32 %v382, %v382
        %v384 = vmul.f32 %v383, 0.25
        %v385 = vsub.f32 %v378, %v352
        %v386 = vmul.f32 %v384, %v385
        %v387 = vsub.f32 %v386, %v381
        %vm388 = vcmask 64512
        %v390 = vsel %vm388, %v355, 0
        %392 = vmatprep.subr.mxu0 0.0
        %393 = vmatpush1.msra.mxu0 0.0
        %394 = vmatprep.subr.mxu0 0.0
        %395 = vmatpush1.msra.mxu0 0.0
        %396 = vmatprep.subr.mxu0 0.0
        %397 = vmatpush1.msra.mxu0 0.0
        %398 = vmatprep.subr.mxu0 0.0
        %399 = vmatpush1.msra.mxu0 0.0
        %400 = vmatprep.subr.mxu0 0.0
        %401 = vmatpush1.msra.mxu0 0.0
        %402 = vmatprep.subr.mxu0 0.0
        %403 = vmatpush1.msra.mxu0 0.0
        %404 = vmatprep.subr.mxu0 0.0
        %405 = vmatpush1.msra.mxu0 0.0
        %406 = vmatprep.subr.mxu0 0.0
        %407 = vmatpush1.msra.mxu0 0.0
        %408 = vmatprep.subr.mxu0 0.0
        %409 = vmatpush1.msra.mxu0 0.0
        %410 = vmatprep.subr.mxu0 0.0
        %411 = vmatpush1.msra.mxu0 0.0
        %412 = vmatprep.subr.mxu0 0.0
        %413 = vmatpush1.msra.mxu0 0.0
        %414 = vmatprep.subr.mxu0 0.0
        %415 = vmatpush1.msra.mxu0 0.0
        %416 = vmatprep.subr.mxu0 0.0
        %417 = vmatpush1.msra.mxu0 0.0
        %418 = vmatprep.subr.mxu0 0.0
        %419 = vmatpush1.msra.mxu0 0.0
        %420 = vmatprep.subr.mxu0 0.0
        %421 = vmatpush1.msra.mxu0 0.0
        %422 = vmatprep.subr.mxu0 0.0
        %423 = vmatpush1.msra.mxu0 %v387
        %424 = vmatprep.subr.mxu0 0.0
        %425 = vmatpush2.msra.mxu0 0.0
        %426 = vmatprep.subr.mxu0 0.0
        %427 = vmatpush2.msra.mxu0 0.0
        %428 = vmatprep.subr.mxu0 0.0
        %429 = vmatpush2.msra.mxu0 0.0
        %430 = vmatprep.subr.mxu0 0.0
        %431 = vmatpush2.msra.mxu0 0.0
        %432 = vmatprep.subr.mxu0 0.0
        %433 = vmatpush2.msra.mxu0 0.0
        %434 = vmatprep.subr.mxu0 0.0
        %435 = vmatpush2.msra.mxu0 0.0
        %436 = vmatprep.subr.mxu0 0.0
        %437 = vmatpush2.msra.mxu0 0.0
        %438 = vmatprep.subr.mxu0 0.0
        %439 = vmatpush2.msra.mxu0 0.0
        %440 = vmatprep.subr.mxu0 0.0
        %441 = vmatpush2.msra.mxu0 0.0
        %442 = vmatprep.subr.mxu0 0.0
        %443 = vmatpush2.msra.mxu0 0.0
        %444 = vmatprep.subr.mxu0 0.0
        %445 = vmatpush2.msra.mxu0 0.0
        %446 = vmatprep.subr.mxu0 0.0
        %447 = vmatpush2.msra.mxu0 0.0
        %448 = vmatprep.subr.mxu0 0.0
        %449 = vmatpush2.msra.mxu0 0.0
        %450 = vmatprep.subr.mxu0 0.0
        %451 = vmatpush2.msra.mxu0 0.0
        %452 = vmatprep.subr.mxu0 0.0
        %453 = vmatpush2.msra.mxu0 0.0
        %454 = vmatprep.subr.mxu0 0.0
        %455 = vmatpush2.msra.mxu0 0.0
        %456 = vmatprep.mubr.f32.mxu0 0.0
        %457 = vmatmul.mubr.f32.gmra.mxu0 %v390
        %v458 = vpop.f32.mrf.mxu0
        %v459 = vadd.f32 0.0, %v458
        %v460 = vpop.f32.mrf.mxu0
        %461 = vdwg.mxu0
        %v462 = vlaneseq
        %v463 = vshrl.u32 %v462, 7
        %v464 = vsub.s32 0, %v463
        %v465 = vrot.slane %v354, %v464
        %467 = vset.pattern.permute.xlu0 0
        %468 = vperm.xlu0 %467, %v357
        %v469 = vpop.permute.xlu0 %468
        %v471 = vsub.f32 %v465, %v469
        %v472 = vand.u32 2147483647, %v471
        %v473 = vlaneseq
        %v474 = vshrl.u32 %v473, 7
        %v475 = vsub.s32 1, %v474
        %v476 = vrot.slane %v354, %v475
        %477 = vset.pattern.permute.xlu0 1
        %478 = vperm.xlu0 %477, %v357
        %v479 = vpop.permute.xlu0 %478
        %v481 = vsub.f32 %v476, %v479
        %v482 = vand.u32 2147483647, %v481
        %v483 = vadd.f32 %v472, %v482
        %v484 = vlaneseq
        %v485 = vshrl.u32 %v484, 7
        %v486 = vsub.s32 2, %v485
        %v487 = vrot.slane %v354, %v486
        %488 = vset.pattern.permute.xlu0 2
        %489 = vperm.xlu0 %488, %v357
        %v490 = vpop.permute.xlu0 %489
        %v492 = vsub.f32 %v487, %v490
        %v493 = vand.u32 2147483647, %v492
        %v494 = vadd.f32 %v483, %v493
        %v495 = vlaneseq
        %v496 = vshrl.u32 %v495, 7
        %v497 = vsub.s32 3, %v496
        %v498 = vrot.slane %v354, %v497
        %499 = vset.pattern.permute.xlu0 3
        %500 = vperm.xlu0 %499, %v357
        %v501 = vpop.permute.xlu0 %500
        %v503 = vsub.f32 %v498, %v501
        %v504 = vand.u32 2147483647, %v503
        %v505 = vadd.f32 %v494, %v504
        %v507 = vrot.slane %v353, 6
        %v509 = vsub.f32 %v353, %v507
        %v511 = vrot.slane %v509, 1
        %v513 = vmul.f32 %v509, %v511
        %515 = vrot.lane.b32.xlu0 %v356, 2
        %v516 = vpop.permute.xlu0 %515
        %v518 = vsub.f32 %v356, %v516
        %520 = vrot.lane.b32.xlu0 %v518, 127
        %v521 = vpop.permute.xlu0 %520
        %v523 = vmul.f32 %v518, %v521
        %v524 = vlaneseq
        %v525 = vshrl.u32 %v524, 7
        %v526 = vsub.s32 0, %v525
        %v527 = vrot.slane %v353, %v526
        %528 = vset.pattern.permute.xlu0 0
        %529 = vperm.xlu0 %528, %v356
        %v530 = vpop.permute.xlu0 %529
        %v532 = vmax.f32 %v527, %v530
        %v533 = vlaneseq
        %v534 = vshrl.u32 %v533, 7
        %v535 = vsub.s32 1, %v534
        %v536 = vrot.slane %v353, %v535
        %537 = vset.pattern.permute.xlu0 1
        %538 = vperm.xlu0 %537, %v356
        %v539 = vpop.permute.xlu0 %538
        %v541 = vmax.f32 %v536, %v539
        %v542 = vlaneseq
        %v543 = vshrl.u32 %v542, 7
        %v544 = vsub.s32 2, %v543
        %v545 = vrot.slane %v353, %v544
        %546 = vset.pattern.permute.xlu0 2
        %547 = vperm.xlu0 %546, %v356
        %v548 = vpop.permute.xlu0 %547
        %v550 = vmin.f32 %v545, %v548
        %v551 = vlaneseq
        %v552 = vshrl.u32 %v551, 7
        %v553 = vsub.s32 3, %v552
        %v554 = vrot.slane %v353, %v553
        %555 = vset.pattern.permute.xlu0 3
        %556 = vperm.xlu0 %555, %v356
        %v557 = vpop.permute.xlu0 %556
        %v559 = vmin.f32 %v554, %v557
        %v560 = vsub.f32 %v550, %v532
        %v561 = vmax.f32 %v560, 0.0
        %v562 = vsub.f32 %v559, %v541
        %v563 = vmax.f32 %v562, 0.0
        %v564 = vmul.f32 %v561, %v563
        %v565 = vlaneseq
        %v566 = vshrl.u32 %v565, 7
        %v567 = vsub.s32 2, %v566
        %v568 = vrot.slane %v513, %v567
        %570 = vset.pattern.permute.xlu0 2
        %571 = vperm.xlu0 %570, %v523
        %v572 = vpop.permute.xlu0 %571
        %v574 = vadd.f32 %v568, %v572
        %v575 = vsub.f32 %v574, %v564
        %v576 = vadd.f32 %v575, 1e-07
        %v577 = vrcp.pop %v576
        %v578 = vmul.f32 %v564, %v577
        %v579 = vmin.f32 %v527, %v530
        %v580 = vmin.f32 %v536, %v539
        %v581 = vmax.f32 %v545, %v548
        %v582 = vmax.f32 %v554, %v557
        %v583 = vsub.f32 %v581, %v579
        %v584 = vmax.f32 %v583, 0.0
        %v585 = vsub.f32 %v582, %v580
        %v586 = vmax.f32 %v585, 0.0
        %v587 = vmul.f32 %v584, %v586
        %v588 = vsub.f32 %v587, %v575
        %v589 = vadd.f32 %v587, 1e-07
        %v590 = vrcp.pop %v589
        %v591 = vmul.f32 %v588, %v590
        %v592 = vsub.f32 %v578, %v591
        %v593 = vmul.f32 %v505, 5.0
        %v594 = vmul.f32 %v459, 2.0
        %v595 = vadd.f32 %v593, %v594
        %v596 = vmul.f32 %v592, 2.0
        %v597 = vsub.f32 %v595, %v596
        %598 = vst [vmem:[%s331] sm:$0xff] %v597
        %s599 = sand.u32 %s187, 1
        %s600 = scalar_lea.sflag [#allocation4], %s599
        %s601 = sand.u32 %s187, 1
        %s602 = smul.addr %s601, 8
        %s603 = scalar_lea.vmem [#allocation5], %s602
        // Predicated region
        $region49: #{tpu_custom_call.1} parent=43 // pred_check
          %p604 = pneg %p197
        $region50: #{tpu_custom_call.1} parent=43 // pred_check_branch
          %606 = sbr.rel (%p604) target = $region52
        $region51: #{tpu_custom_call.1} parent=43 // pred_region
          %s608 = ssub.s32 128, 128
          %609 = vsyncadd %s600, %s608
          %s610 = smul.addr %s23, 128
          %s611 = scalar_lea.hbm %s6, %s610
          %s613 = sshll.u32 %s603, 4
          %s614 = int_to_ptr.vmem [resolvable:$true] %s613
          %616 = dma.vmem_to_hbm [thread:$0]  %s614, 128, %s611, %s600
        $region52: #{tpu_custom_call.1} parent=43 // pred_fallthru
          _
      $region44: #{tpu_custom_call.1} parent=5 // pred_fallthru
        _
      %p617 = scmp.le.s32.totalorder 2, %s18
      // Predicated region
      $region53: #{tpu_custom_call.1} parent=5 // pred_check
        %p618 = pneg %p617
      $region54: #{tpu_custom_call.1} parent=5 // pred_check_branch
        %620 = sbr.rel (%p618) target = $region56
      $region55: #{tpu_custom_call.1} parent=5 // pred_region
        %s621 = ssub.s32 %s18, 2
        // Predicated region
        $region57: #{tpu_custom_call.1} parent=55 // pred_check
          %p622 = pneg %p203
        $region58: #{tpu_custom_call.1} parent=55 // pred_check_branch
          %624 = sbr.rel (%p622) target = $region60
        $region59: #{tpu_custom_call.1} parent=55 // pred_region
          %s625 = sand.u32 %s188, 1
          %s626 = scalar_lea.sflag [#allocation4], %s625
          %s627 = sand.u32 %s188, 1
          %s628 = smul.addr %s627, 8
          %s629 = scalar_lea.vmem [#allocation5], %s628
          %630 = dma.done %s626, 128
        $region60: #{tpu_custom_call.1} parent=55 // pred_fallthru
          _
      $region56: #{tpu_custom_call.1} parent=5 // pred_fallthru
        _
    $region6: #{tpu_custom_call.1} parent=1 // loop_footer
      %s22 = sadd.s32 1, %s18
    $region7: #{tpu_custom_call.1} parent=1 // loop_footer_branch
      %17 = sbr.rel target = $region3
    $region8: #{tpu_custom_call.1} parent=1 // loop_exit
      _
    %631 = vsyncpa [#allocation3], 1
    %s632 = scalar_lea.sflag [#allocation3], 1
    %633 = vsyncpa %s632, 1
    %634 = vsyncpa [#allocation4], 1
    %s635 = scalar_lea.sflag [#allocation4], 1
    %636 = vsyncpa %s635, 1

</llo_original>
